<compile_context>
chip_gen: v7x
topology: tpu7x:2x2x1
jax: 0.10.0
libtpu: 0.0.40
codegen_flags: <defaults>
</compile_context>

<pallas_src>
import functools

import jax
import jax.numpy as jnp
import numpy as np
from jax.experimental import pallas as pl
from jax.experimental.pallas import tpu as pltpu

EPS = 1e-5                       # nn.LayerNorm default eps
VMEM_LIMIT = 32 * 1024 * 1024    # explicit scoped-VMEM budget (safe on v5e/v6e/v7x)


# ---------------------------------------------------------------------------
# in-kernel helpers
# ---------------------------------------------------------------------------
def _layernorm(x, gamma, beta):
    # x: (N, D), gamma/beta: (1, D); stats in f32
    mean = jnp.mean(x, axis=-1, keepdims=True)
    centered = x - mean
    var = jnp.mean(centered * centered, axis=-1, keepdims=True)
    return centered * jax.lax.rsqrt(var + EPS) * gamma + beta


# ---------------------------------------------------------------------------
# kernels
# ---------------------------------------------------------------------------
def patch_embed_kernel(p_ref, pos_ref, g1_ref, b1_ref, w_ref, bl_ref,
                       g2_ref, b2_ref, o_ref):
    # p_ref: (1, TN, PD) ; pos_ref: (TN, D) ; out: (1, TN, D)
    p = p_ref[0]
    x = _layernorm(p, g1_ref[...], b1_ref[...])
    x = jnp.dot(x, w_ref[...], preferred_element_type=jnp.float32) + bl_ref[...]
    x = _layernorm(x, g2_ref[...], b2_ref[...])
    o_ref[0] = (x + pos_ref[...]).astype(o_ref.dtype)


def layer_kernel(x_ref, ag_ref, ab_ref, wq_ref, wk_ref, wv_ref, wo_ref,
                 fg_ref, fb_ref, w1_ref, b1_ref, w2_ref, b2_ref, o_ref,
                 *, heads):
    # Fused transformer layer: x -> x + Attn(LN(x)); x -> x + MLP(LN(x)).
    # x_ref: (1, N, D).  Attention needs full N, so the grid is over batch.
    # TODO(synk): for large N, tile the q dimension flash-style inside this kernel.
    x = x_ref[0]                                            # (N, D)
    n, d = x.shape

    # ---------------- attention ----------------
    xn = _layernorm(x, ag_ref[...], ab_ref[...])
    xh = jnp.broadcast_to(xn[None, :, :], (heads, n, d))    # (H, N, D)

    # batched per-head projections; softmax scale already folded into wq
    q = jnp.einsum("hnd,hde->hne", xh, wq_ref[...],
                   preferred_element_type=jnp.float32)      # (H, N, dh)
    k = jnp.einsum("hnd,hde->hne", xh, wk_ref[...],
                   preferred_element_type=jnp.float32)
    v = jnp.einsum("hnd,hde->hne", xh, wv_ref[...],
                   preferred_element_type=jnp.float32)

    dots = jnp.einsum("hqe,hke->hqk", q, k,
                      preferred_element_type=jnp.float32)   # (H, N, N)
    dots = dots - jnp.max(dots, axis=-1, keepdims=True)
    e = jnp.exp(dots)
    attn = e * pl.reciprocal(jnp.sum(e, axis=-1, keepdims=True), approx=True)
    oh = jnp.einsum("hqk,hke->hqe", attn, v,
                    preferred_element_type=jnp.float32)     # (H, N, dh)

    # per-head output projection accumulated over heads (no concatenate)
    proj = jnp.einsum("hne,hed->hnd", oh, wo_ref[...],
                      preferred_element_type=jnp.float32)   # (H, N, D)
    x = x + jnp.sum(proj, axis=0)                           # residual

    # ---------------- feed-forward ----------------
    xn2 = _layernorm(x, fg_ref[...], fb_ref[...])
    h = jnp.dot(xn2, w1_ref[...], preferred_element_type=jnp.float32) + b1_ref[...]
    h = jax.nn.gelu(h, approximate=False)                   # exact GELU == torch nn.GELU()
    f = jnp.dot(h, w2_ref[...], preferred_element_type=jnp.float32) + b2_ref[...]
    o_ref[0] = (x + f).astype(o_ref.dtype)                  # residual


def final_norm_kernel(x_ref, g1_ref, b1_ref, g2_ref, b2_ref, o_ref):
    # transformer final LayerNorm followed by linear_head (also a LayerNorm)
    x = _layernorm(x_ref[0], g1_ref[...], b1_ref[...])
    o_ref[0] = _layernorm(x, g2_ref[...], b2_ref[...]).astype(o_ref.dtype)


# ---------------------------------------------------------------------------
# pallas_call wrappers
# ---------------------------------------------------------------------------
def _const_spec(a, grid_ndim):
    # weight / bias kept VMEM-resident at a constant block index
    zeros = (0,) * a.ndim
    if grid_ndim == 1:
        return pl.BlockSpec(a.shape, lambda b, _z=zeros: _z)
    return pl.BlockSpec(a.shape, lambda b, t, _z=zeros: _z)


_CP_1D = pltpu.CompilerParams(dimension_semantics=("parallel",),
                              vmem_limit_bytes=VMEM_LIMIT)
_CP_2D = pltpu.CompilerParams(dimension_semantics=("parallel", "parallel"),
                              vmem_limit_bytes=VMEM_LIMIT)


def patch_embed(patches, pos, g1, b1, w, bl, g2, b2, dim, token_tile=128):
    B, N, PD = patches.shape
    tn = min(token_tile, N)
    assert N % tn == 0
    weights = (g1, b1, w, bl, g2, b2)
    return pl.pallas_call(
        patch_embed_kernel,
        out_shape=jax.ShapeDtypeStruct((B, N, dim), patches.dtype),
        grid=(B, N // tn),
        in_specs=[pl.BlockSpec((1, tn, PD), lambda b, t: (b, t, 0)),
                  pl.BlockSpec((tn, dim), lambda b, t: (t, 0))]
                 + [_const_spec(o, 2) for o in weights],
        out_specs=pl.BlockSpec((1, tn, dim), lambda b, t: (b, t, 0)),
        compiler_params=_CP_2D,
    )(patches, pos, *weights)


def transformer_layer(x, lw, heads):
    B, N, D = x.shape
    ops = (lw["attn_g"], lw["attn_b"],
           lw["wq3"], lw["wk3"], lw["wv3"], lw["wo3"],
           lw["ff_g"], lw["ff_b"],
           lw["w1"], lw["b1"], lw["w2"], lw["b2"])
    kern = functools.partial(layer_kernel, heads=heads)
    return pl.pallas_call(
        kern,
        out_shape=jax.ShapeDtypeStruct((B, N, D), x.dtype),
        grid=(B,),
        in_specs=[pl.BlockSpec((1, N, D), lambda b: (b, 0, 0))]
                 + [_const_spec(o, 1) for o in ops],
        out_specs=pl.BlockSpec((1, N, D), lambda b: (b, 0, 0)),
        compiler_params=_CP_1D,
    )(x, *ops)


def final_norms(x, g1, b1, g2, b2, token_tile=128):
    B, N, D = x.shape
    tn = min(token_tile, N)
    assert N % tn == 0
    ops = (g1, b1, g2, b2)
    return pl.pallas_call(
        final_norm_kernel,
        out_shape=jax.ShapeDtypeStruct((B, N, D), x.dtype),
        grid=(B, N // tn),
        in_specs=[pl.BlockSpec((1, tn, D), lambda b, t: (b, t, 0))]
                 + [_const_spec(o, 2) for o in ops],
        out_specs=pl.BlockSpec((1, tn, D), lambda b, t: (b, t, 0)),
        compiler_params=_CP_2D,
    )(x, *ops)


# ---------------------------------------------------------------------------
# model glue (plain JAX outside kernels)
# ---------------------------------------------------------------------------
def posemb_sincos_2d(h, w, dim, temperature=10000.0):
    assert dim % 4 == 0
    y, x = jnp.meshgrid(jnp.arange(h), jnp.arange(w), indexing="ij")
    omega = jnp.arange(dim // 4) / (dim // 4 - 1)
    omega = 1.0 / (temperature ** omega)
    y = y.flatten().astype(jnp.float32)[:, None] * omega[None, :]
    x = x.flatten().astype(jnp.float32)[:, None] * omega[None, :]
    return jnp.concatenate(
        [jnp.sin(x), jnp.cos(x), jnp.sin(y), jnp.cos(y)], axis=1
    ).astype(jnp.float32)


def patchify(img, patch):
    # img: (B, C, H, W)  ->  (B, (H/p)*(W/p), p*p*C)
    B, C, H, W = img.shape
    h, w = H // patch, W // patch
    x = img.reshape(B, C, h, patch, w, patch)
    x = x.transpose(0, 2, 4, 3, 5, 1)          # b h w p1 p2 c
    return x.reshape(B, h * w, patch * patch * C)


def _prep_layer(layer, heads, dim_head, scale):
    # Split wqkv into head-major (H, dim, dh) weights, fold softmax scale into
    # wq, and reshape wout into (H, dh, dim).  All plain-JAX (free glue).
    dim = layer["wqkv"].shape[0]
    wq, wk, wv = jnp.split(layer["wqkv"], 3, axis=-1)        # each (dim, inner)
    to_h = lambda w: w.reshape(dim, heads, dim_head).transpose(1, 0, 2)
    out = dict(layer)
    out["wq3"] = to_h(wq) * scale
    out["wk3"] = to_h(wk)
    out["wv3"] = to_h(wv)
    out["wo3"] = layer["wout"].reshape(heads, dim_head, dim)
    return out


def simple_vit_forward(img, params, cfg):
    heads, dim_head = cfg["heads"], cfg["dim_head"]
    scale = dim_head ** (-0.5)

    patches = patchify(img, cfg["patch"])
    x = patch_embed(patches, params["pos"],
                    params["pe_g1"], params["pe_b1"], params["pe_w"],
                    params["pe_bl"], params["pe_g2"], params["pe_b2"],
                    cfg["dim"])

    for layer in params["layers"]:
        lw = _prep_layer(layer, heads, dim_head, scale)
        x = transformer_layer(x, lw, heads)

    # Transformer final LayerNorm + linear_head LayerNorm, fused in one kernel.
    x = final_norms(x, params["tn_g"], params["tn_b"],
                    params["head_g"], params["head_b"])
    return x


# ---------------------------------------------------------------------------
# pure-JAX reference for verification
# ---------------------------------------------------------------------------
def _ln_ref(x, g, b):
    m = x.mean(-1, keepdims=True)
    v = ((x - m) ** 2).mean(-1, keepdims=True)
    return (x - m) / jnp.sqrt(v + EPS) * g + b


def simple_vit_ref(img, params, cfg):
    heads, dim_head = cfg["heads"], cfg["dim_head"]
    scale = dim_head ** (-0.5)
    with jax.default_matmul_precision("highest"):
        p = patchify(img, cfg["patch"])
        x = _ln_ref(p, params["pe_g1"], params["pe_b1"])
        x = x @ params["pe_w"] + params["pe_bl"]
        x = _ln_ref(x, params["pe_g2"], params["pe_b2"])
        x = x + params["pos"][None]
        B, N, D = x.shape
        for layer in params["layers"]:
            xn = _ln_ref(x, layer["attn_g"], layer["attn_b"])
            qkv = xn @ layer["wqkv"]
            q, k, v = jnp.split(qkv, 3, axis=-1)
            rs = lambda t: t.reshape(B, N, heads, dim_head).transpose(0, 2, 1, 3)
            q, k, v = rs(q), rs(k), rs(v)
            dots = jnp.einsum("bhnd,bhmd->bhnm", q, k) * scale
            attn = jax.nn.softmax(dots, axis=-1)
            o = jnp.einsum("bhnm,bhmd->bhnd", attn, v)
            o = o.transpose(0, 2, 1, 3).reshape(B, N, heads * dim_head)
            x = o @ layer["wout"] + x
            xn = _ln_ref(x, layer["ff_g"], layer["ff_b"])
            h = jax.nn.gelu(xn @ layer["w1"] + layer["b1"], approximate=False)
            x = h @ layer["w2"] + layer["b2"] + x
        x = _ln_ref(x, params["tn_g"], params["tn_b"])
        x = _ln_ref(x, params["head_g"], params["head_b"])
    return x


# ---------------------------------------------------------------------------
# deterministic parameter construction
# ---------------------------------------------------------------------------
def make_params(key, cfg):
    dim, heads, dim_head, mlp = cfg["dim"], cfg["heads"], cfg["dim_head"], cfg["mlp"]
    patch_dim = cfg["channels"] * cfg["patch"] * cfg["patch"]
    inner = heads * dim_head
    keys = iter(jax.random.split(key, 64))
    nrm = lambda shape: 0.02 * jax.random.normal(next(keys), shape, jnp.float32)
    row = lambda n: jnp.ones((1, n), jnp.float32)
    zrow = lambda n: jnp.zeros((1, n), jnp.float32)

    params = {
        "pos": posemb_sincos_2d(cfg["img"] // cfg["patch"],
                                cfg["img"] // cfg["patch"], dim),
        "pe_g1": row(patch_dim), "pe_b1": zrow(patch_dim),
        "pe_w": nrm((patch_dim, dim)), "pe_bl": zrow(dim),
        "pe_g2": row(dim), "pe_b2": zrow(dim),
        "tn_g": row(dim), "tn_b": zrow(dim),
        "head_g": row(dim), "head_b": zrow(dim),
        "layers": [],
    }
    for _ in range(cfg["depth"]):
        params["layers"].append({
            "attn_g": row(dim), "attn_b": zrow(dim),
            "wqkv": nrm((dim, 3 * inner)),
            "wout": nrm((inner, dim)),
            "ff_g": row(dim), "ff_b": zrow(dim),
            "w1": nrm((dim, mlp)), "b1": zrow(mlp),
            "w2": nrm((mlp, dim)), "b2": zrow(dim),
        })
    return params


# ---------------------------------------------------------------------------
if __name__ == "__main__":
    cfg = dict(img=16, patch=4, channels=4, dim=32, depth=2,
               heads=4, dim_head=8, mlp=64)
    B = 2

    key = jax.random.PRNGKey(0)
    k_img, k_par = jax.random.split(key)
    img = jax.random.normal(k_img, (B, cfg["channels"], cfg["img"], cfg["img"]),
                            jnp.float32)          # NCHW, like PyTorch
    params = make_params(k_par, cfg)

    out = jax.block_until_ready(simple_vit_forward(img, params, cfg))
    assert out.shape == (B, (cfg["img"] // cfg["patch"]) ** 2, cfg["dim"])

    ref = jax.block_until_ready(simple_vit_ref(img, params, cfg))
    np.testing.assert_allclose(np.asarray(out), np.asarray(ref),
                               rtol=1e-2, atol=1e-2)
    print("KERNEL_OK")
</pallas_src>

<mosaic_0001>
module attributes {stable_mosaic.version = 11 : i64} {
  func.func @patch_embed_kernel(%arg0: i32, %arg1: i32, %arg2: memref<1x16x64xf32, #tpu.memory_space<vmem>>, %arg3: memref<16x32xf32, #tpu.memory_space<vmem>>, %arg4: memref<1x64xf32, #tpu.memory_space<vmem>>, %arg5: memref<1x64xf32, #tpu.memory_space<vmem>>, %arg6: memref<64x32xf32, #tpu.memory_space<vmem>>, %arg7: memref<1x32xf32, #tpu.memory_space<vmem>>, %arg8: memref<1x32xf32, #tpu.memory_space<vmem>>, %arg9: memref<1x32xf32, #tpu.memory_space<vmem>>, %arg10: memref<1x16x32xf32, #tpu.memory_space<vmem>>) attributes {dimension_semantics = [#tpu.dimension_semantics<parallel>, #tpu.dimension_semantics<parallel>], iteration_bounds = array<i64: 2, 1>, scalar_prefetch = 0 : i64, scratch_operands = 0 : i64, tpu.core_type = #tpu.core_type<tc>, window_params = [{transform_indices = @transform_0, window_bounds = array<i64: 1, 16, 64>}, {transform_indices = @transform_1, window_bounds = array<i64: 16, 32>}, {pipeline_mode = #tpu.pipeline_mode<synchronous>, transform_indices = @transform_2, window_bounds = array<i64: 1, 64>}, {pipeline_mode = #tpu.pipeline_mode<synchronous>, transform_indices = @transform_3, window_bounds = array<i64: 1, 64>}, {pipeline_mode = #tpu.pipeline_mode<synchronous>, transform_indices = @transform_4, window_bounds = array<i64: 64, 32>}, {pipeline_mode = #tpu.pipeline_mode<synchronous>, transform_indices = @transform_5, window_bounds = array<i64: 1, 32>}, {pipeline_mode = #tpu.pipeline_mode<synchronous>, transform_indices = @transform_6, window_bounds = array<i64: 1, 32>}, {pipeline_mode = #tpu.pipeline_mode<synchronous>, transform_indices = @transform_7, window_bounds = array<i64: 1, 32>}, {transform_indices = @transform_8, window_bounds = array<i64: 1, 16, 32>}]} {
    %c0 = arith.constant 0 : index
    %c0_0 = arith.constant 0 : index
    %c0_1 = arith.constant 0 : index
    %0 = vector.load %arg2[%c0, %c0_0, %c0_1] : memref<1x16x64xf32, #tpu.memory_space<vmem>>, vector<1x16x64xf32>
    %1 = vector.shape_cast %0 : vector<1x16x64xf32> to vector<16x64xf32>
    %c0_2 = arith.constant 0 : index
    %c0_3 = arith.constant 0 : index
    %2 = vector.load %arg4[%c0_2, %c0_3] : memref<1x64xf32, #tpu.memory_space<vmem>>, vector<1x64xf32>
    %c0_4 = arith.constant 0 : index
    %c0_5 = arith.constant 0 : index
    %3 = vector.load %arg5[%c0_4, %c0_5] : memref<1x64xf32, #tpu.memory_space<vmem>>, vector<1x64xf32>
    %cst = arith.constant dense<0.000000e+00> : vector<16xf32>
    %4 = vector.multi_reduction <add>, %1, %cst [1] : vector<16x64xf32> to vector<16xf32>
    %5 = vector.shape_cast %4 : vector<16xf32> to vector<16x1xf32>
    %cst_6 = arith.constant 6.400000e+01 : f32
    %6 = vector.broadcast %cst_6 : f32 to vector<16x1xf32>
    %7 = arith.divf %5, %6 : vector<16x1xf32>
    %8 = vector.broadcast %7 : vector<16x1xf32> to vector<16x64xf32>
    %9 = arith.subf %1, %8 : vector<16x64xf32>
    %10 = arith.mulf %9, %9 : vector<16x64xf32>
    %cst_7 = arith.constant dense<0.000000e+00> : vector<16xf32>
    %11 = vector.multi_reduction <add>, %10, %cst_7 [1] : vector<16x64xf32> to vector<16xf32>
    %12 = vector.shape_cast %11 : vector<16xf32> to vector<16x1xf32>
    %cst_8 = arith.constant 6.400000e+01 : f32
    %13 = vector.broadcast %cst_8 : f32 to vector<16x1xf32>
    %14 = arith.divf %12, %13 : vector<16x1xf32>
    %cst_9 = arith.constant 9.99999974E-6 : f32
    %15 = vector.broadcast %cst_9 : f32 to vector<16x1xf32>
    %16 = arith.addf %14, %15 : vector<16x1xf32>
    %17 = math.rsqrt %16 : vector<16x1xf32>
    %18 = vector.broadcast %17 : vector<16x1xf32> to vector<16x64xf32>
    %19 = arith.mulf %9, %18 : vector<16x64xf32>
    %20 = vector.broadcast %2 : vector<1x64xf32> to vector<16x64xf32>
    %21 = arith.mulf %19, %20 : vector<16x64xf32>
    %22 = vector.broadcast %3 : vector<1x64xf32> to vector<16x64xf32>
    %23 = arith.addf %21, %22 : vector<16x64xf32>
    %c0_10 = arith.constant 0 : index
    %c0_11 = arith.constant 0 : index
    %24 = vector.load %arg6[%c0_10, %c0_11] : memref<64x32xf32, #tpu.memory_space<vmem>>, vector<64x32xf32>
    %cst_12 = arith.constant dense<0.000000e+00> : vector<16x32xf32>
    %25 = tpu.matmul %23, %24, %cst_12 {dimension_numbers = #tpu.dot_dimension_numbers<[1], [0], [0], [1], [0, 0, 1, 1], [], []>} : vector<16x64xf32>, vector<64x32xf32>, vector<16x32xf32> -> vector<16x32xf32>
    %c0_13 = arith.constant 0 : index
    %c0_14 = arith.constant 0 : index
    %26 = vector.load %arg7[%c0_13, %c0_14] : memref<1x32xf32, #tpu.memory_space<vmem>>, vector<1x32xf32>
    %27 = vector.broadcast %26 : vector<1x32xf32> to vector<16x32xf32>
    %28 = arith.addf %25, %27 : vector<16x32xf32>
    %c0_15 = arith.constant 0 : index
    %c0_16 = arith.constant 0 : index
    %29 = vector.load %arg8[%c0_15, %c0_16] : memref<1x32xf32, #tpu.memory_space<vmem>>, vector<1x32xf32>
    %c0_17 = arith.constant 0 : index
    %c0_18 = arith.constant 0 : index
    %30 = vector.load %arg9[%c0_17, %c0_18] : memref<1x32xf32, #tpu.memory_space<vmem>>, vector<1x32xf32>
    %cst_19 = arith.constant dense<0.000000e+00> : vector<16xf32>
    %31 = vector.multi_reduction <add>, %28, %cst_19 [1] : vector<16x32xf32> to vector<16xf32>
    %32 = vector.shape_cast %31 : vector<16xf32> to vector<16x1xf32>
    %cst_20 = arith.constant 3.200000e+01 : f32
    %33 = vector.broadcast %cst_20 : f32 to vector<16x1xf32>
    %34 = arith.divf %32, %33 : vector<16x1xf32>
    %35 = vector.broadcast %34 : vector<16x1xf32> to vector<16x32xf32>
    %36 = arith.subf %28, %35 : vector<16x32xf32>
    %37 = arith.mulf %36, %36 : vector<16x32xf32>
    %cst_21 = arith.constant dense<0.000000e+00> : vector<16xf32>
    %38 = vector.multi_reduction <add>, %37, %cst_21 [1] : vector<16x32xf32> to vector<16xf32>
    %39 = vector.shape_cast %38 : vector<16xf32> to vector<16x1xf32>
    %cst_22 = arith.constant 3.200000e+01 : f32
    %40 = vector.broadcast %cst_22 : f32 to vector<16x1xf32>
    %41 = arith.divf %39, %40 : vector<16x1xf32>
    %cst_23 = arith.constant 9.99999974E-6 : f32
    %42 = vector.broadcast %cst_23 : f32 to vector<16x1xf32>
    %43 = arith.addf %41, %42 : vector<16x1xf32>
    %44 = math.rsqrt %43 : vector<16x1xf32>
    %45 = vector.broadcast %44 : vector<16x1xf32> to vector<16x32xf32>
    %46 = arith.mulf %36, %45 : vector<16x32xf32>
    %47 = vector.broadcast %29 : vector<1x32xf32> to vector<16x32xf32>
    %48 = arith.mulf %46, %47 : vector<16x32xf32>
    %49 = vector.broadcast %30 : vector<1x32xf32> to vector<16x32xf32>
    %50 = arith.addf %48, %49 : vector<16x32xf32>
    %c0_24 = arith.constant 0 : index
    %c0_25 = arith.constant 0 : index
    %51 = vector.load %arg3[%c0_24, %c0_25] : memref<16x32xf32, #tpu.memory_space<vmem>>, vector<16x32xf32>
    %52 = arith.addf %50, %51 : vector<16x32xf32>
    %c0_26 = arith.constant 0 : index
    %c0_27 = arith.constant 0 : index
    %c0_28 = arith.constant 0 : index
    %53 = vector.load %arg10[%c0_26, %c0_27, %c0_28] : memref<1x16x32xf32, #tpu.memory_space<vmem>>, vector<1x16x32xf32>
    %54 = vector.shape_cast %53 : vector<1x16x32xf32> to vector<16x32xf32>
    %55 = vector.shape_cast %52 : vector<16x32xf32> to vector<1x16x32xf32>
    tpu.vector_store %arg10[%c0_26, %c0_27, %c0_28], %55 {strides = array<i32>} : memref<1x16x32xf32, #tpu.memory_space<vmem>>, vector<1x16x32xf32>,
    return
  }
  func.func @transform_0(%arg0: i32, %arg1: i32) -> (i32, i32, i32) {
    %c0_i32 = arith.constant 0 : i32
    %c0_i32_0 = arith.constant 0 : i32
    return %arg0, %arg1, %c0_i32 : i32, i32, i32
  }
  func.func @transform_1(%arg0: i32, %arg1: i32) -> (i32, i32) {
    %c0_i32 = arith.constant 0 : i32
    %c0_i32_0 = arith.constant 0 : i32
    return %arg1, %c0_i32 : i32, i32
  }
  func.func @transform_2(%arg0: i32, %arg1: i32) -> (i32, i32) {
    %c0_i32 = arith.constant 0 : i32
    %c0_i32_0 = arith.constant 0 : i32
    %c0_i32_1 = arith.constant 0 : i32
    return %c0_i32, %c0_i32_0 : i32, i32
  }
  func.func @transform_3(%arg0: i32, %arg1: i32) -> (i32, i32) {
    %c0_i32 = arith.constant 0 : i32
    %c0_i32_0 = arith.constant 0 : i32
    %c0_i32_1 = arith.constant 0 : i32
    return %c0_i32, %c0_i32_0 : i32, i32
  }
  func.func @transform_4(%arg0: i32, %arg1: i32) -> (i32, i32) {
    %c0_i32 = arith.constant 0 : i32
    %c0_i32_0 = arith.constant 0 : i32
    %c0_i32_1 = arith.constant 0 : i32
    return %c0_i32, %c0_i32_0 : i32, i32
  }
  func.func @transform_5(%arg0: i32, %arg1: i32) -> (i32, i32) {
    %c0_i32 = arith.constant 0 : i32
    %c0_i32_0 = arith.constant 0 : i32
    %c0_i32_1 = arith.constant 0 : i32
    return %c0_i32, %c0_i32_0 : i32, i32
  }
  func.func @transform_6(%arg0: i32, %arg1: i32) -> (i32, i32) {
    %c0_i32 = arith.constant 0 : i32
    %c0_i32_0 = arith.constant 0 : i32
    %c0_i32_1 = arith.constant 0 : i32
    return %c0_i32, %c0_i32_0 : i32, i32
  }
  func.func @transform_7(%arg0: i32, %arg1: i32) -> (i32, i32) {
    %c0_i32 = arith.constant 0 : i32
    %c0_i32_0 = arith.constant 0 : i32
    %c0_i32_1 = arith.constant 0 : i32
    return %c0_i32, %c0_i32_0 : i32, i32
  }
  func.func @transform_8(%arg0: i32, %arg1: i32) -> (i32, i32, i32) {
    %c0_i32 = arith.constant 0 : i32
    %c0_i32_0 = arith.constant 0 : i32
    return %arg0, %arg1, %c0_i32 : i32, i32, i32
  }
}

</mosaic_0001>

<llo_original>
// kernel: tpu_custom_call.1
$region0: #{tpu_custom_call.1}
  #allocation0 [shape = 'u32[]', space=smem, size = 0x4, offset = 0x4, fixed_abs, tag = 'smem constant byte address 0x4 - core index']
  #allocation1 [shape = 'u32[144,128]{1,0:T(1,128)}', space=vmem, size = 0x12000, scoped, tag = 'internal scratch']
  %s0 = inlined_call_operand.vmem [shape: f32[2,16,64], index: 0, kind: input, shape index: {}]
  %s1 = inlined_call_operand.vmem [shape: f32[16,32], index: 1, kind: input, shape index: {}]
  %s2 = inlined_call_operand.vmem [shape: f32[1,64], index: 2, kind: input, shape index: {}]
  %s3 = inlined_call_operand.vmem [shape: f32[1,64], index: 3, kind: input, shape index: {}]
  %s4 = inlined_call_operand.vmem [shape: f32[64,32], index: 4, kind: input, shape index: {}]
  %s5 = inlined_call_operand.vmem [shape: f32[1,32], index: 5, kind: input, shape index: {}]
  %s6 = inlined_call_operand.vmem [shape: f32[1,32], index: 6, kind: input, shape index: {}]
  %s7 = inlined_call_operand.vmem [shape: f32[1,32], index: 7, kind: input, shape index: {}]
  %s8 = inlined_call_operand.hbm [shape: f32[2,16,32], index: 8, kind: output, shape index: {}]
  %s9 = sld [smem:[#allocation0]]
  $region65: #{tpu_custom_call.1} parent=0
    _
  %s11 = ssub.s32 1, %s9
  %s12 = scalar_select 0, %s11, %s9
  $region1: #{tpu_custom_call.1} parent=0
    #allocation2 [shape = 'u8[16384]{0}', space=vmem, size = 0x4000, scoped, tag = 'output window, operand 0']
    #allocation3 [shape = 's32[2]{0}', space=sflag, size = 0x8, scoped, tag = 'scoped memory for tpu_custom_call.1']
    %13 = vsyncpa [#allocation3], 0
    %s14 = scalar_lea.sflag [#allocation3], 1
    %15 = vsyncpa %s14, 0
    loop: start=0, step=1, limit=4
    $region2: #{tpu_custom_call.1} parent=1 // loop_pre_header
      _
    $region3: #{tpu_custom_call.1} parent=1 // loop_header
      %s17 = sphi 0, %s21
      %p18 = scmp.ge.s32.totalorder %s17, 4
      %s24 = sphi 0, %s36
      %s25 = sphi 0, %s32
      %s26 = sphi 0, %s24
      %s27 = sphi 0, %s25
      %s28 = sphi 0, %s26
      %s29 = sphi 0, %s27
      %s41 = sphi 0, %s43
      %s44 = sphi 0, %s41
      %s45 = sphi 0, %s44
      %s61 = sphi 0, %s45
      %s67 = sphi 0, %s69
      %s70 = sphi 0, %s67
      %s71 = sphi 0, %s70
      %s87 = sphi 0, %s71
      %s91 = sphi 0, %s91
      %s93 = sphi 0, %s91
      %s94 = sphi 0, %s93
      %s108 = sphi 0, %s94
      %s112 = sphi 0, %s112
      %s114 = sphi 0, %s112
      %s115 = sphi 0, %s114
      %s129 = sphi 0, %s115
      %s133 = sphi 0, %s133
      %s135 = sphi 0, %s133
      %s136 = sphi 0, %s135
      %s150 = sphi 0, %s136
      %s154 = sphi 0, %s154
      %s156 = sphi 0, %s154
      %s157 = sphi 0, %s156
      %s171 = sphi 0, %s157
      %s175 = sphi 0, %s175
      %s177 = sphi 0, %s175
      %s178 = sphi 0, %s177
      %s192 = sphi 0, %s178
      %s196 = sphi 0, %s196
      %s198 = sphi 0, %s196
      %s199 = sphi 0, %s198
      %s213 = sphi 0, %s199
      %s221 = sphi 0, %s223
      %s224 = sphi 0, %s221
      %s225 = sphi 0, %s224
      %s241 = sphi 0, %s225
    $region4: #{tpu_custom_call.1} parent=1 // loop_header_branch
      %20 = sbr.rel (%p18) target = $region8
    $region5: #{tpu_custom_call.1} parent=1 // loop_body
      %s22 = ssub.s32 %s17, 1
      %s23 = ssub.s32 %s17, 2
      %s30 = sadd.s32 1, %s25
      %p31 = scmp.ge.s32.totalorder %s30, 1
      %s32 = scalar_select %p31, 0, %s30
      %s33 = sadd.s32 1, %s24
      %s34 = scalar_select %p31, %s33, %s24
      %p35 = scmp.ge.s32.totalorder %s34, 2
      %s36 = scalar_select %p35, 0, %s34
      %s37 = ssub.s32 %s24, %s36
      %s38 = ssub.s32 %s25, %s32
      %s39 = sor.u32 %s37, %s38
      %p40 = scmp.eq.s32.totalorder %s39, 0
      %s42 = sadd.s32 %s41, 1
      %s43 = scalar_select %p40, %s41, %s42
      %p46 = pneg %p40
      %p47 = scmp.eq.s32.totalorder %s17, 1
      %p48 = por %p46, %p47
      %p49 = scmp.ne.s32.totalorder %s41, %s44
      %p50 = scmp.eq.s32.totalorder %s17, 0
      %p51 = por %p49, %p50
      %p52 = scmp.ne.s32.totalorder %s41, %s44
      %p53 = scmp.eq.s32.totalorder %s22, 1
      %p54 = por %p52, %p53
      %p55 = scmp.ne.s32.totalorder %s44, %s45
      %p56 = scmp.eq.s32.totalorder %s22, 0
      %p57 = por %p55, %p56
      %p58 = scmp.ne.s32.totalorder %s44, %s45
      %p59 = scmp.eq.s32.totalorder %s23, 1
      %p60 = por %p58, %p59
      %p62 = scmp.ne.s32.totalorder %s45, %s61
      %p63 = scmp.eq.s32.totalorder %s23, 0
      %p64 = por %p62, %p63
      %s65 = ssub.s32 %s25, %s32
      %p66 = scmp.eq.s32.totalorder %s65, 0
      %s68 = sadd.s32 %s67, 1
      %s69 = scalar_select %p66, %s67, %s68
      %p72 = pneg %p66
      %p73 = scmp.eq.s32.totalorder %s17, 1
      %p74 = por %p72, %p73
      %p75 = scmp.ne.s32.totalorder %s67, %s70
      %p76 = scmp.eq.s32.totalorder %s17, 0
      %p77 = por %p75, %p76
      %p78 = scmp.ne.s32.totalorder %s67, %s70
      %p79 = scmp.eq.s32.totalorder %s22, 1
      %p80 = por %p78, %p79
      %p81 = scmp.ne.s32.totalorder %s70, %s71
      %p82 = scmp.eq.s32.totalorder %s22, 0
      %p83 = por %p81, %p82
      %p84 = scmp.ne.s32.totalorder %s70, %s71
      %p85 = scmp.eq.s32.totalorder %s23, 1
      %p86 = por %p84, %p85
      %p88 = scmp.ne.s32.totalorder %s71, %s87
      %p89 = scmp.eq.s32.totalorder %s23, 0
      %p90 = por %p88, %p89
      %s92 = sadd.s32 %s91, 1
      %p95 = scmp.eq.s32.totalorder %s17, 1
      %p96 = scmp.ne.s32.totalorder %s91, %s93
      %p97 = scmp.eq.s32.totalorder %s17, 0
      %p98 = por %p96, %p97
      %p99 = scmp.ne.s32.totalorder %s91, %s93
      %p100 = scmp.eq.s32.totalorder %s22, 1
      %p101 = por %p99, %p100
      %p102 = scmp.ne.s32.totalorder %s93, %s94
      %p103 = scmp.eq.s32.totalorder %s22, 0
      %p104 = por %p102, %p103
      %p105 = scmp.ne.s32.totalorder %s93, %s94
      %p106 = scmp.eq.s32.totalorder %s23, 1
      %p107 = por %p105, %p106
      %p109 = scmp.ne.s32.totalorder %s94, %s108
      %p110 = scmp.eq.s32.totalorder %s23, 0
      %p111 = por %p109, %p110
      %s113 = sadd.s32 %s112, 1
      %p116 = scmp.eq.s32.totalorder %s17, 1
      %p117 = scmp.ne.s32.totalorder %s112, %s114
      %p118 = scmp.eq.s32.totalorder %s17, 0
      %p119 = por %p117, %p118
      %p120 = scmp.ne.s32.totalorder %s112, %s114
      %p121 = scmp.eq.s32.totalorder %s22, 1
      %p122 = por %p120, %p121
      %p123 = scmp.ne.s32.totalorder %s114, %s115
      %p124 = scmp.eq.s32.totalorder %s22, 0
      %p125 = por %p123, %p124
      %p126 = scmp.ne.s32.totalorder %s114, %s115
      %p127 = scmp.eq.s32.totalorder %s23, 1
      %p128 = por %p126, %p127
      %p130 = scmp.ne.s32.totalorder %s115, %s129
      %p131 = scmp.eq.s32.totalorder %s23, 0
      %p132 = por %p130, %p131
      %s134 = sadd.s32 %s133, 1
      %p137 = scmp.eq.s32.totalorder %s17, 1
      %p138 = scmp.ne.s32.totalorder %s133, %s135
      %p139 = scmp.eq.s32.totalorder %s17, 0
      %p140 = por %p138, %p139
      %p141 = scmp.ne.s32.totalorder %s133, %s135
      %p142 = scmp.eq.s32.totalorder %s22, 1
      %p143 = por %p141, %p142
      %p144 = scmp.ne.s32.totalorder %s135, %s136
      %p145 = scmp.eq.s32.totalorder %s22, 0
      %p146 = por %p144, %p145
      %p147 = scmp.ne.s32.totalorder %s135, %s136
      %p148 = scmp.eq.s32.totalorder %s23, 1
      %p149 = por %p147, %p148
      %p151 = scmp.ne.s32.totalorder %s136, %s150
      %p152 = scmp.eq.s32.totalorder %s23, 0
      %p153 = por %p151, %p152
      %s155 = sadd.s32 %s154, 1
      %p158 = scmp.eq.s32.totalorder %s17, 1
      %p159 = scmp.ne.s32.totalorder %s154, %s156
      %p160 = scmp.eq.s32.totalorder %s17, 0
      %p161 = por %p159, %p160
      %p162 = scmp.ne.s32.totalorder %s154, %s156
      %p163 = scmp.eq.s32.totalorder %s22, 1
      %p164 = por %p162, %p163
      %p165 = scmp.ne.s32.totalorder %s156, %s157
      %p166 = scmp.eq.s32.totalorder %s22, 0
      %p167 = por %p165, %p166
      %p168 = scmp.ne.s32.totalorder %s156, %s157
      %p169 = scmp.eq.s32.totalorder %s23, 1
      %p170 = por %p168, %p169
      %p172 = scmp.ne.s32.totalorder %s157, %s171
      %p173 = scmp.eq.s32.totalorder %s23, 0
      %p174 = por %p172, %p173
      %s176 = sadd.s32 %s175, 1
      %p179 = scmp.eq.s32.totalorder %s17, 1
      %p180 = scmp.ne.s32.totalorder %s175, %s177
      %p181 = scmp.eq.s32.totalorder %s17, 0
      %p182 = por %p180, %p181
      %p183 = scmp.ne.s32.totalorder %s175, %s177
      %p184 = scmp.eq.s32.totalorder %s22, 1
      %p185 = por %p183, %p184
      %p186 = scmp.ne.s32.totalorder %s177, %s178
      %p187 = scmp.eq.s32.totalorder %s22, 0
      %p188 = por %p186, %p187
      %p189 = scmp.ne.s32.totalorder %s177, %s178
      %p190 = scmp.eq.s32.totalorder %s23, 1
      %p191 = por %p189, %p190
      %p193 = scmp.ne.s32.totalorder %s178, %s192
      %p194 = scmp.eq.s32.totalorder %s23, 0
      %p195 = por %p193, %p194
      %s197 = sadd.s32 %s196, 1
      %p200 = scmp.eq.s32.totalorder %s17, 1
      %p201 = scmp.ne.s32.totalorder %s196, %s198
      %p202 = scmp.eq.s32.totalorder %s17, 0
      %p203 = por %p201, %p202
      %p204 = scmp.ne.s32.totalorder %s196, %s198
      %p205 = scmp.eq.s32.totalorder %s22, 1
      %p206 = por %p204, %p205
      %p207 = scmp.ne.s32.totalorder %s198, %s199
      %p208 = scmp.eq.s32.totalorder %s22, 0
      %p209 = por %p207, %p208
      %p210 = scmp.ne.s32.totalorder %s198, %s199
      %p211 = scmp.eq.s32.totalorder %s23, 1
      %p212 = por %p210, %p211
      %p214 = scmp.ne.s32.totalorder %s199, %s213
      %p215 = scmp.eq.s32.totalorder %s23, 0
      %p216 = por %p214, %p215
      %s217 = ssub.s32 %s24, %s36
      %s218 = ssub.s32 %s25, %s32
      %s219 = sor.u32 %s217, %s218
      %p220 = scmp.eq.s32.totalorder %s219, 0
      %s222 = sadd.s32 %s221, 1
      %s223 = scalar_select %p220, %s221, %s222
      %p226 = pneg %p220
      %p227 = scmp.eq.s32.totalorder %s17, 1
      %p228 = por %p226, %p227
      %p229 = scmp.ne.s32.totalorder %s221, %s224
      %p230 = scmp.eq.s32.totalorder %s17, 0
      %p231 = por %p229, %p230
      %p232 = scmp.ne.s32.totalorder %s221, %s224
      %p233 = scmp.eq.s32.totalorder %s22, 1
      %p234 = por %p232, %p233
      %p235 = scmp.ne.s32.totalorder %s224, %s225
      %p236 = scmp.eq.s32.totalorder %s22, 0
      %p237 = por %p235, %p236
      %p238 = scmp.ne.s32.totalorder %s224, %s225
      %p239 = scmp.eq.s32.totalorder %s23, 1
      %p240 = por %p238, %p239
      %p242 = scmp.ne.s32.totalorder %s225, %s241
      %p243 = scmp.eq.s32.totalorder %s23, 0
      %p244 = por %p242, %p243
      %p245 = scmp.le.s32.totalorder 1, %s17
      %p246 = scmp.lt.s32.totalorder %s17, 3
      %p247 = pnand %p245, %p246
      %p248 = pneg %p247
      // Predicated region
      $region9: #{tpu_custom_call.1} parent=5 // pred_check
        _
      $region10: #{tpu_custom_call.1} parent=5 // pred_check_branch
        %250 = sbr.rel (%p247) target = $region12
      $region11: #{tpu_custom_call.1} parent=5 // pred_region
        %s251 = ssub.s32 %s17, 1
        // Predicated region
        $region13: #{tpu_custom_call.1} parent=11 // pred_check
          %p252 = pneg %p83
        $region14: #{tpu_custom_call.1} parent=11 // pred_check_branch
          %254 = sbr.rel (%p252) target = $region16
        $region15: #{tpu_custom_call.1} parent=11 // pred_region
          %s255 = smul.u32 2, %s27
          %p256 = scmp.lt.s32.totalorder %s255, 1
          %s257 = scalar_select %p256, %s255, 1
          %s258 = smul.addr %s257, 8
          %s259 = scalar_lea.vmem %s1, %s258
          %s260 = smul.u32 2, %s27
        $region16: #{tpu_custom_call.1} parent=11 // pred_fallthru
          _
        // Predicated region
        $region17: #{tpu_custom_call.1} parent=11 // pred_check
          %p261 = pneg %p104
        $region18: #{tpu_custom_call.1} parent=11 // pred_check_branch
          %263 = sbr.rel (%p261) target = $region20
        $region19: #{tpu_custom_call.1} parent=11 // pred_region
          _
        $region20: #{tpu_custom_call.1} parent=11 // pred_fallthru
          _
        // Predicated region
        $region21: #{tpu_custom_call.1} parent=11 // pred_check
          %p264 = pneg %p125
        $region22: #{tpu_custom_call.1} parent=11 // pred_check_branch
          %266 = sbr.rel (%p264) target = $region24
        $region23: #{tpu_custom_call.1} parent=11 // pred_region
          _
        $region24: #{tpu_custom_call.1} parent=11 // pred_fallthru
          _
        // Predicated region
        $region25: #{tpu_custom_call.1} parent=11 // pred_check
          %p267 = pneg %p146
        $region26: #{tpu_custom_call.1} parent=11 // pred_check_branch
          %269 = sbr.rel (%p267) target = $region28
        $region27: #{tpu_custom_call.1} parent=11 // pred_region
          _
        $region28: #{tpu_custom_call.1} parent=11 // pred_fallthru
          _
        // Predicated region
        $region29: #{tpu_custom_call.1} parent=11 // pred_check
          %p270 = pneg %p167
        $region30: #{tpu_custom_call.1} parent=11 // pred_check_branch
          %272 = sbr.rel (%p270) target = $region32
        $region31: #{tpu_custom_call.1} parent=11 // pred_region
          _
        $region32: #{tpu_custom_call.1} parent=11 // pred_fallthru
          _
        // Predicated region
        $region33: #{tpu_custom_call.1} parent=11 // pred_check
          %p273 = pneg %p188
        $region34: #{tpu_custom_call.1} parent=11 // pred_check_branch
          %275 = sbr.rel (%p273) target = $region36
        $region35: #{tpu_custom_call.1} parent=11 // pred_region
          _
        $region36: #{tpu_custom_call.1} parent=11 // pred_fallthru
          _
        // Predicated region
        $region37: #{tpu_custom_call.1} parent=11 // pred_check
          %p276 = pneg %p209
        $region38: #{tpu_custom_call.1} parent=11 // pred_check_branch
          %278 = sbr.rel (%p276) target = $region40
        $region39: #{tpu_custom_call.1} parent=11 // pred_region
          _
        $region40: #{tpu_custom_call.1} parent=11 // pred_fallthru
          _
      $region12: #{tpu_custom_call.1} parent=5 // pred_fallthru
        _
      %p279 = scmp.lt.s32.totalorder %s17, 2
      // Predicated region
      $region41: #{tpu_custom_call.1} parent=5 // pred_check
        %p280 = pneg %p279
      $region42: #{tpu_custom_call.1} parent=5 // pred_check_branch
        %282 = sbr.rel (%p280) target = $region44
      $region43: #{tpu_custom_call.1} parent=5 // pred_region
        // Predicated region
        $region45: #{tpu_custom_call.1} parent=43 // pred_check
          %p283 = pneg %p51
        $region46: #{tpu_custom_call.1} parent=43 // pred_check_branch
          %285 = sbr.rel (%p283) target = $region48
        $region47: #{tpu_custom_call.1} parent=43 // pred_region
          %s286 = smul.u32 2, %s25
          %p287 = scmp.lt.s32.totalorder %s24, 1
          %s288 = scalar_select %p287, %s24, 1
          %p289 = scmp.lt.s32.totalorder %s286, 1
          %s290 = scalar_select %p289, %s286, 1
          %s291 = smul.addr %s288, 2
          %s292 = sadd.s32 %s290, %s291
          %s293 = smul.addr %s292, 8
          %s294 = scalar_lea.vmem %s0, %s293
          %s295 = smul.u32 2, %s25
        $region48: #{tpu_custom_call.1} parent=43 // pred_fallthru
          _
      $region44: #{tpu_custom_call.1} parent=5 // pred_fallthru
        _
      %p296 = scmp.le.s32.totalorder 1, %s17
      %p297 = scmp.lt.s32.totalorder %s17, 3
      %p298 = pnand %p296, %p297
      %p299 = pneg %p298
      // Predicated region
      $region49: #{tpu_custom_call.1} parent=5 // pred_check
        _
      $region50: #{tpu_custom_call.1} parent=5 // pred_check_branch
        %301 = sbr.rel (%p298) target = $region52
      $region51: #{tpu_custom_call.1} parent=5 // pred_region
        %s302 = ssub.s32 %s17, 1
        %s303 = smul.u32 2, %s27
        %p304 = scmp.lt.s32.totalorder %s26, 1
        %s305 = scalar_select %p304, %s26, 1
        %p306 = scmp.lt.s32.totalorder %s303, 1
        %s307 = scalar_select %p306, %s303, 1
        %s308 = smul.addr %s305, 2
        %s309 = sadd.s32 %s307, %s308
        %s310 = smul.addr %s309, 8
        %s311 = scalar_lea.vmem %s0, %s310
        %p312 = pneg %p57
        %p313 = pneg %p54
        %s314 = smul.u32 2, %s27
        %p315 = scmp.lt.s32.totalorder %s314, 1
        %s316 = scalar_select %p315, %s314, 1
        %s317 = smul.addr %s316, 8
        %s318 = scalar_lea.vmem %s1, %s317
        %p319 = pneg %p83
        %p320 = pneg %p80
        %p321 = pneg %p104
        %p322 = pneg %p101
        %p323 = pneg %p125
        %p324 = pneg %p122
        %p325 = pneg %p146
        %p326 = pneg %p143
        %p327 = pneg %p167
        %p328 = pneg %p164
        %p329 = pneg %p188
        %p330 = pneg %p185
        %p331 = pneg %p209
        %p332 = pneg %p206
        %p333 = pneg %p237
        %p334 = pneg %p234
        %s335 = sand.u32 %s224, 1
        %s336 = scalar_lea.sflag [#allocation3], %s335
        %s337 = sand.u32 %s224, 1
        %s338 = smul.addr %s337, 16
        %s339 = scalar_lea.vmem [#allocation2], %s338
        %s340 = smul.u32 2, %s27
        %p341 = scmp.lt.s32.totalorder %s26, 1
        %s342 = scalar_select %p341, %s26, 1
        %p343 = scmp.lt.s32.totalorder %s340, 1
        %s344 = scalar_select %p343, %s340, 1
        %s345 = smul.addr %s342, 2
        %s346 = sadd.s32 %s344, %s345
        %s347 = smul.addr %s346, 8
        %s348 = scalar_lea.vmem %s0, %s347
        %s349 = smul.u32 2, %s27
        %s350 = smul.u32 2, %s27
        %p351 = scmp.lt.s32.totalorder %s350, 1
        %s352 = scalar_select %p351, %s350, 1
        %s353 = smul.addr %s352, 8
        %s354 = scalar_lea.vmem %s1, %s353
        %s355 = smul.u32 2, %s27
        %s356 = smul.u32 2, %s27
        %v357 = vld [vmem:[%s348] sm:$0xff]
        %v358 = vld [vmem:[%s348 + $0x8] sm:$0xff]
        %v359 = vld [vmem:[%s2] sm:$0x1]
        %v360 = vld [vmem:[%s3] sm:$0x1]
        %vm361 = vcmask 523264
        %v362 = vsel %vm361, %v357, 0.0
        %363 = vadd.xlane.f32.xlu0 %v362
        %v364 = vpop.xlane.xlu0 %363
        %v365 = vsel %vm361, %v358, 0.0
        %366 = vadd.xlane.f32.xlu0 %v365
        %v367 = vpop.xlane.xlu0 %366
        %v368 = vrcp.pop 64.0
        %v369 = vmul.f32 %v364, %v368
        %v370 = vmul.f32 %v367, %v368
        %v371 = vsub.f32 %v357, %v369
        %v372 = vsub.f32 %v358, %v370
        %v373 = vmul.f32 %v371, %v371
        %v374 = vmul.f32 %v372, %v372
        %v375 = vsel %vm361, %v373, 0.0
        %376 = vadd.xlane.f32.xlu0 %v375
        %v377 = vpop.xlane.xlu0 %376
        %v378 = vsel %vm361, %v374, 0.0
        %379 = vadd.xlane.f32.xlu0 %v378
        %v380 = vpop.xlane.xlu0 %379
        %v381 = vmul.f32 %v377, %v368
        %v382 = vmul.f32 %v380, %v368
        %v383 = vadd.f32 %v381, 1e-05
        %v384 = vadd.f32 %v382, 1e-05
        %v385 = vrsqrt.pop %v383
        %v386 = vrsqrt.pop %v384
        %v387 = vmul.f32 %v371, %v385
        %v388 = vmul.f32 %v372, %v386
        %v390 = vlaneseq
        %v391 = vshrl.u32 %v390, 7
        %v392 = vsub.s32 0, %v391
        %v393 = vrot.slane %v359, %v392
        %v395 = vmul.f32 %v387, %v393
        %v396 = vmul.f32 %v388, %v393
        %v398 = vlaneseq
        %v399 = vshrl.u32 %v398, 7
        %v400 = vsub.s32 0, %v399
        %v401 = vrot.slane %v360, %v400
        %v403 = vadd.f32 %v395, %v401
        %v404 = vadd.f32 %v396, %v401
        %v405 = vld [vmem:[%s4] sm:$0xff]
        %v406 = vld [vmem:[%s4 + $0x8] sm:$0xff]
        %v407 = vld [vmem:[%s4 + $0x10] sm:$0xff]
        %v408 = vld [vmem:[%s4 + $0x18] sm:$0xff]
        %v409 = vld [vmem:[%s4 + $0x20] sm:$0xff]
        %v410 = vld [vmem:[%s4 + $0x28] sm:$0xff]
        %v411 = vld [vmem:[%s4 + $0x30] sm:$0xff]
        %v412 = vld [vmem:[%s4 + $0x38] sm:$0xff]
        %v413 = vld [vmem:[%s5] sm:$0x1]
        %v415 = vlaneseq
        %v416 = vshrl.u32 %v415, 7
        %v417 = vsub.s32 0, %v416
        %v418 = vrot.slane %v413, %v417
        %v421 = vsel %vm361, %v403, 0
        %v424 = vsel %vm361, %v404, 0
        %426 = vmatprep.subr.mxu0 0.0
        %427 = vmatpush1.msra.mxu0 %v405
        %428 = vmatprep.subr.mxu0 0.0
        %429 = vmatpush1.msra.mxu0 %v406
        %430 = vmatprep.subr.mxu0 0.0
        %431 = vmatpush1.msra.mxu0 %v407
        %432 = vmatprep.subr.mxu0 0.0
        %433 = vmatpush1.msra.mxu0 %v408
        %434 = vmatprep.subr.mxu0 0.0
        %435 = vmatpush1.msra.mxu0 %v409
        %436 = vmatprep.subr.mxu0 0.0
        %437 = vmatpush1.msra.mxu0 %v410
        %438 = vmatprep.subr.mxu0 0.0
        %439 = vmatpush1.msra.mxu0 %v411
        %440 = vmatprep.subr.mxu0 0.0
        %441 = vmatpush1.msra.mxu0 %v412
        %442 = vmatprep.subr.mxu0 0.0
        %443 = vmatpush1.msra.mxu0 0.0
        %444 = vmatprep.subr.mxu0 0.0
        %445 = vmatpush1.msra.mxu0 0.0
        %446 = vmatprep.subr.mxu0 0.0
        %447 = vmatpush1.msra.mxu0 0.0
        %448 = vmatprep.subr.mxu0 0.0
        %449 = vmatpush1.msra.mxu0 0.0
        %450 = vmatprep.subr.mxu0 0.0
        %451 = vmatpush1.msra.mxu0 0.0
        %452 = vmatprep.subr.mxu0 0.0
        %453 = vmatpush1.msra.mxu0 0.0
        %454 = vmatprep.subr.mxu0 0.0
        %455 = vmatpush1.msra.mxu0 0.0
        %456 = vmatprep.subr.mxu0 0.0
        %457 = vmatpush1.msra.mxu0 0.0
        %458 = vmatprep.subr.mxu0 0.0
        %459 = vmatpush1.msra.mxu0 0.0
        %460 = vmatprep.subr.mxu0 0.0
        %461 = vmatpush1.msra.mxu0 0.0
        %462 = vmatprep.subr.mxu0 0.0
        %463 = vmatpush1.msra.mxu0 0.0
        %464 = vmatprep.subr.mxu0 0.0
        %465 = vmatpush1.msra.mxu0 0.0
        %466 = vmatprep.subr.mxu0 0.0
        %467 = vmatpush1.msra.mxu0 0.0
        %468 = vmatprep.subr.mxu0 0.0
        %469 = vmatpush1.msra.mxu0 0.0
        %470 = vmatprep.subr.mxu0 0.0
        %471 = vmatpush1.msra.mxu0 0.0
        %472 = vmatprep.subr.mxu0 0.0
        %473 = vmatpush1.msra.mxu0 0.0
        %474 = vmatprep.subr.mxu0 0.0
        %475 = vmatpush1.msra.mxu0 0.0
        %476 = vmatprep.subr.mxu0 0.0
        %477 = vmatpush1.msra.mxu0 0.0
        %478 = vmatprep.subr.mxu0 0.0
        %479 = vmatpush1.msra.mxu0 0.0
        %480 = vmatprep.subr.mxu0 0.0
        %481 = vmatpush1.msra.mxu0 0.0
        %482 = vmatprep.subr.mxu0 0.0
        %483 = vmatpush1.msra.mxu0 0.0
        %484 = vmatprep.subr.mxu0 0.0
        %485 = vmatpush1.msra.mxu0 0.0
        %486 = vmatprep.subr.mxu0 0.0
        %487 = vmatpush1.msra.mxu0 0.0
        %488 = vmatprep.subr.mxu0 0.0
        %489 = vmatpush1.msra.mxu0 0.0
        %490 = vmatprep.mubr.f32.mxu0 0.0
        %491 = vmatmul.mubr.f32.gmra.mrb[0].mxu0 %v421
        %v492 = vpop.f32.mrb[0].mxu0
        %v493 = vadd.f32 %v418, %v492
        %v494 = vpop.f32.mrb[0].mxu0
        %495 = vmatprep.mubr.f32.mxu0 0.0
        %496 = vmatmul.mubr.f32.gmra.mrb[0].mxu0 %v424
        %v497 = vpop.f32.mrb[0].mxu0
        %v498 = vadd.f32 %v418, %v497
        %v499 = vpop.f32.mrb[0].mxu0
        %500 = vdwg.mxu0
        %v501 = vld [vmem:[%s6] sm:$0x1]
        %v502 = vld [vmem:[%s7] sm:$0x1]
        %vm503 = vcmask 261120
        %v504 = vsel %vm503, %v493, 0.0
        %505 = vadd.xlane.f32.xlu0 %v504
        %v506 = vpop.xlane.xlu0 %505
        %v507 = vsel %vm503, %v498, 0.0
        %508 = vadd.xlane.f32.xlu0 %v507
        %v509 = vpop.xlane.xlu0 %508
        %v510 = vrcp.pop 32.0
        %v511 = vmul.f32 %v506, %v510
        %v512 = vmul.f32 %v509, %v510
        %v513 = vsub.f32 %v493, %v511
        %v514 = vsub.f32 %v498, %v512
        %v515 = vmul.f32 %v513, %v513
        %v516 = vmul.f32 %v514, %v514
        %v517 = vsel %vm503, %v515, 0.0
        %518 = vadd.xlane.f32.xlu0 %v517
        %v519 = vpop.xlane.xlu0 %518
        %v520 = vsel %vm503, %v516, 0.0
        %521 = vadd.xlane.f32.xlu0 %v520
        %v522 = vpop.xlane.xlu0 %521
        %v523 = vmul.f32 %v519, %v510
        %v524 = vmul.f32 %v522, %v510
        %v525 = vadd.f32 %v523, 1e-05
        %v526 = vadd.f32 %v524, 1e-05
        %v527 = vrsqrt.pop %v525
        %v528 = vrsqrt.pop %v526
        %v529 = vmul.f32 %v513, %v527
        %v530 = vmul.f32 %v514, %v528
        %v532 = vlaneseq
        %v533 = vshrl.u32 %v532, 7
        %v534 = vsub.s32 0, %v533
        %v535 = vrot.slane %v501, %v534
        %v537 = vmul.f32 %v529, %v535
        %v538 = vmul.f32 %v530, %v535
        %v540 = vlaneseq
        %v541 = vshrl.u32 %v540, 7
        %v542 = vsub.s32 0, %v541
        %v543 = vrot.slane %v502, %v542
        %v545 = vadd.f32 %v537, %v543
        %v546 = vadd.f32 %v538, %v543
        %v547 = vld [vmem:[%s354] sm:$0xff]
        %v548 = vld [vmem:[%s354 + $0x8] sm:$0xff]
        %v549 = vadd.f32 %v545, %v547
        %v550 = vadd.f32 %v546, %v548
        %551 = vst.msk [vmem:[%s339] sm:$0xff] %vm503, %v549
        %552 = vst.msk [vmem:[%s339 + $0x8] sm:$0xff] %vm503, %v550
        %s553 = sand.u32 %s224, 1
        %s554 = scalar_lea.sflag [#allocation3], %s553
        %s555 = sand.u32 %s224, 1
        %s556 = smul.addr %s555, 16
        %s557 = scalar_lea.vmem [#allocation2], %s556
        // Predicated region
        $region53: #{tpu_custom_call.1} parent=51 // pred_check
          %p558 = pneg %p234
        $region54: #{tpu_custom_call.1} parent=51 // pred_check_branch
          %560 = sbr.rel (%p558) target = $region56
        $region55: #{tpu_custom_call.1} parent=51 // pred_region
          %s561 = smul.u32 2, %s27
          %s563 = ssub.s32 256, 256
          %564 = vsyncadd %s554, %s563
          %s565 = smul.addr %s26, 2
          %s566 = sadd.s32 %s561, %s565
          %s567 = smul.addr %s566, 128
          %s568 = scalar_lea.hbm %s8, %s567
          %s569 = sshll.u32 %s557, 4
          %s570 = int_to_ptr.vmem [resolvable:$true] %s569
          %575 = dma.vmem_to_hbm [thread:$0]  %s570, 256, %s568, %s554, 128, 128, 8
        $region56: #{tpu_custom_call.1} parent=51 // pred_fallthru
          _
      $region52: #{tpu_custom_call.1} parent=5 // pred_fallthru
        _
      %p576 = scmp.le.s32.totalorder 2, %s17
      // Predicated region
      $region57: #{tpu_custom_call.1} parent=5 // pred_check
        %p577 = pneg %p576
      $region58: #{tpu_custom_call.1} parent=5 // pred_check_branch
        %579 = sbr.rel (%p577) target = $region60
      $region59: #{tpu_custom_call.1} parent=5 // pred_region
        %s580 = ssub.s32 %s17, 2
        // Predicated region
        $region61: #{tpu_custom_call.1} parent=59 // pred_check
          %p581 = pneg %p240
        $region62: #{tpu_custom_call.1} parent=59 // pred_check_branch
          %583 = sbr.rel (%p581) target = $region64
        $region63: #{tpu_custom_call.1} parent=59 // pred_region
          %s584 = sand.u32 %s225, 1
          %s585 = scalar_lea.sflag [#allocation3], %s584
          %s586 = sand.u32 %s225, 1
          %s587 = smul.addr %s586, 16
          %s588 = scalar_lea.vmem [#allocation2], %s587
          %589 = dma.done %s585, 256
        $region64: #{tpu_custom_call.1} parent=59 // pred_fallthru
          _
      $region60: #{tpu_custom_call.1} parent=5 // pred_fallthru
        _
    $region6: #{tpu_custom_call.1} parent=1 // loop_footer
      %s21 = sadd.s32 1, %s17
    $region7: #{tpu_custom_call.1} parent=1 // loop_footer_branch
      %16 = sbr.rel target = $region3
    $region8: #{tpu_custom_call.1} parent=1 // loop_exit
      _
    %590 = vsyncpa [#allocation3], 1
    %s591 = scalar_lea.sflag [#allocation3], 1
    %592 = vsyncpa %s591, 1

</llo_original>
